<compile_context>
chip_gen: v7x
topology: tpu7x:2x2x1
jax: 0.10.0
libtpu: 0.0.40
codegen_flags: <defaults>
</compile_context>

<pallas_src>
import functools
import math

import jax
import jax.numpy as jnp
from jax.experimental import pallas as pl
from jax.experimental.pallas import tpu as pltpu

INF = 1e20                       # PyTorch masks with a finite -1e20, not -inf.

_LANE = 128
_TINY_VMEM_BUDGET = 12 << 20     # per-batch fully-resident path threshold
_TILED_VMEM_BUDGET = 36 << 20    # per-step live-set target for block_q auto-pick
_VMEM_LIMIT = 56 << 20           # scoped VMEM limit handed to Mosaic (< v7x 64 MiB)


def _round_up(x, m):
    return ((x + m - 1) // m) * m


# ----------------------------------------------------------------------------
# Shared masked-softmax tail (f32 scores in, f32 probabilities out)
# ----------------------------------------------------------------------------
def _masked_softmax(scores, mask, n_valid, approx_recip, exp_dtype):
    if mask is not None:
        scores = jnp.where(mask != 0, scores, -INF)
    if n_valid < scores.shape[-1]:
        # Node-count padding: mask padded key columns in-kernel (cheap VPU
        # compare against a static bound, no extra HBM mask stream).
        col = jax.lax.broadcasted_iota(jnp.int32, scores.shape, 1)
        scores = jnp.where(col < n_valid, scores, -INF)
    m = jnp.max(scores, axis=-1, keepdims=True)
    e = jnp.exp((scores - m).astype(exp_dtype)).astype(jnp.float32)
    s = jnp.sum(e, axis=-1, keepdims=True)
    if approx_recip:
        return e * pl.reciprocal(s, approx=True)      # EUP slot, ~free
    return e / s


# ----------------------------------------------------------------------------
# Kernel 1: per-batch fully-resident path, grid = (B,), batch axis parallel.
# ----------------------------------------------------------------------------
def _gl_batch_kernel(ctx_ref, wqk_ref, *refs, scale, has_mask, mask_is_2d,
                     hp, n_valid, approx_recip, exp_dtype):
    if has_mask:
        mask_ref, out_ref = refs
    else:
        (out_ref,) = refs

    x = ctx_ref[0]                                              # (Np, D)
    # One fused (Np, D) x (D, 2*Hp) projection for both Q and K (f32 accumulate).
    qk = jnp.dot(x, wqk_ref[...], preferred_element_type=jnp.float32)
    qk = qk.astype(x.dtype)                                     # keep bf16 matmuls bf16
    q = qk[:, :hp]                                              # lane-aligned split
    k = qk[:, hp:]

    # Contraction over Hp; K never transposed/materialised.
    scores = jax.lax.dot_general(
        q, k, (((1,), (1,)), ((), ())),
        preferred_element_type=jnp.float32) * scale             # (Np, Np) f32

    mask = None
    if has_mask:
        mask = mask_ref[...] if mask_is_2d else mask_ref[0]
    out_ref[0] = _masked_softmax(scores, mask, n_valid, approx_recip,
                                 exp_dtype).astype(out_ref.dtype)


# ----------------------------------------------------------------------------
# Kernel 2: query-tiled path, grid = (n_split, B, n_qt // n_split).
# Q/K are built once per (split, batch) into VMEM scratch; each step computes
# one (block_q, Np) slab of attention.
# ----------------------------------------------------------------------------
def _gl_tiled_kernel(ctx_ref, wqk_ref, *refs, scale, has_mask, mask_is_2d,
                     hp, n_valid, block_q, approx_recip, exp_dtype):
    if has_mask:
        mask_ref, out_ref, q_scr, k_scr = refs
    else:
        out_ref, q_scr, k_scr = refs

    @pl.when(pl.program_id(2) == 0)
    def _():
        qk = jnp.dot(ctx_ref[0], wqk_ref[...],
                     preferred_element_type=jnp.float32)        # (Np, 2*Hp) f32
        q_scr[...] = qk[:, :hp].astype(q_scr.dtype)
        k_scr[...] = qk[:, hp:].astype(k_scr.dtype)

    qi = pl.program_id(0) * pl.num_programs(2) + pl.program_id(2)
    q_start = pl.multiple_of(qi * block_q, block_q)
    q = q_scr[pl.ds(q_start, block_q), :]                       # (block_q, Hp)
    k = k_scr[...]                                              # (Np, Hp)

    scores = jax.lax.dot_general(
        q, k, (((1,), (1,)), ((), ())),
        preferred_element_type=jnp.float32) * scale             # (block_q, Np) f32

    mask = None
    if has_mask:
        mask = mask_ref[...] if mask_is_2d else mask_ref[0]
    out_ref[0] = _masked_softmax(scores, mask, n_valid, approx_recip,
                                 exp_dtype).astype(out_ref.dtype)


# ----------------------------------------------------------------------------
# Wrapper
# ----------------------------------------------------------------------------
def graph_learner_self_attention(context, wq, wk, attn_mask=None, *,
                                 block_q=None, out_dtype=jnp.bfloat16,
                                 approx_reciprocal=True, exp_in_bf16=False):
    """GraphLearner 'self_attention' forward.

    context:   (B, N, D)                    f32 or bf16
    wq, wk:    (H, D)  PyTorch nn.Linear weights (out_features, in_features)
    attn_mask: (B, N, N) or (N, N) or None; 0 entries are masked out (-1e20).
               bool / int8 masks are used as-is (recommended); other dtypes
               are quantized to int8 once.
    block_q:   None -> auto (VMEM-budgeted); must divide the (padded) N.
    out_dtype: default bf16 (halves the dominant B*N*N HBM write); use
               jnp.float32 for exact PyTorch output precision.
    approx_reciprocal: EUP approximate 1/x in the softmax denominator
               (rows sum to 1 within ~1e-3); set False for exact division.
    exp_in_bf16: compute the exponent in bf16 (v6e/v7x EUP win; keep False
               on v5e).
    returns:   (B, N, N) attention, dtype `out_dtype`.
    """
    B, N, D = context.shape
    H = wq.shape[0]
    scale = 1.0 / math.sqrt(H)
    exp_dtype = jnp.bfloat16 if exp_in_bf16 else jnp.float32

    # Fused, pre-transposed, lane-padded weights: [W_Q^T | W_K^T] -> (D, 2*Hp).
    hp = _round_up(H, _LANE)
    wq_t, wk_t = wq.T, wk.T
    if hp != H:
        wq_t = jnp.pad(wq_t, ((0, 0), (0, hp - H)))
        wk_t = jnp.pad(wk_t, ((0, 0), (0, hp - H)))
    wqk_t = jnp.concatenate([wq_t, wk_t], axis=1).astype(context.dtype)

    # Pad node count to a lane (128) multiple for lane-dense output stores.
    np_ = N if (N <= _LANE or N % _LANE == 0) else _round_up(N, _LANE)
    if np_ != N:
        context = jnp.pad(context, ((0, 0), (0, np_ - N), (0, 0)))

    has_mask = attn_mask is not None
    mask = None
    mask_is_2d = False
    if has_mask:
        mask_is_2d = attn_mask.ndim == 2
        if attn_mask.dtype in (jnp.bool_, jnp.int8):
            mask = attn_mask.astype(jnp.int8)       # no-op for int8, 1B pass for bool
        else:
            mask = (attn_mask != 0).astype(jnp.int8)
        if np_ != N:
            pad = ((0, np_ - N), (0, np_ - N)) if mask_is_2d else \
                  ((0, 0), (0, np_ - N), (0, np_ - N))
            mask = jnp.pad(mask, pad)               # padded entries -> masked out

    ctx_it = jnp.dtype(context.dtype).itemsize
    out_it = jnp.dtype(out_dtype).itemsize
    mask_bytes = 0
    if has_mask:
        mask_bytes = np_ * np_ if mask_is_2d else B * np_ * np_

    cost = pl.CostEstimate(
        flops=2 * B * np_ * D * 2 * hp + 2 * B * np_ * np_ * hp,
        transcendentals=B * np_ * np_,
        bytes_accessed=(B * np_ * D * ctx_it + D * 2 * hp * ctx_it
                        + mask_bytes + B * np_ * np_ * out_it))

    common = dict(scale=scale, has_mask=has_mask, mask_is_2d=mask_is_2d,
                  hp=hp, n_valid=N, approx_recip=approx_reciprocal,
                  exp_dtype=exp_dtype)

    # ---- per-batch fully-resident path --------------------------------------
    def _tiny_bytes():
        b = (2 * np_ * D * ctx_it            # context block (double-buffered)
             + 2 * D * 2 * hp * ctx_it       # fused weights
             + 2 * np_ * np_ * out_it        # output block
             + 2 * np_ * np_ * 4             # f32 scores / exp temporaries
             + 2 * np_ * hp * 4)             # projected Q/K temporary
        if has_mask:
            b += 2 * np_ * np_
        return b

    if block_q is None and _tiny_bytes() <= _TINY_VMEM_BUDGET:
        kernel = functools.partial(_gl_batch_kernel, **common)
        in_specs = [
            pl.BlockSpec((1, np_, D), lambda b: (b, 0, 0)),      # context / batch
            pl.BlockSpec((D, 2 * hp), lambda b: (0, 0)),         # [W_Q^T | W_K^T]
        ]
        args = [context, wqk_t]
        if has_mask:
            if mask_is_2d:
                in_specs.append(pl.BlockSpec((np_, np_), lambda b: (0, 0)))
            else:
                in_specs.append(pl.BlockSpec((1, np_, np_), lambda b: (b, 0, 0)))
            args.append(mask)
        out = pl.pallas_call(
            kernel,
            out_shape=jax.ShapeDtypeStruct((B, np_, np_), out_dtype),
            grid_spec=pltpu.PrefetchScalarGridSpec(
                num_scalar_prefetch=0,
                grid=(B,),
                in_specs=in_specs,
                out_specs=pl.BlockSpec((1, np_, np_), lambda b: (b, 0, 0)),
            ),
            compiler_params=pltpu.CompilerParams(
                dimension_semantics=("parallel",),
                vmem_limit_bytes=_VMEM_LIMIT),
            cost_estimate=cost,
        )(*args)
        return out if np_ == N else out[:, :N, :N]

    # ---- query-tiled path ----------------------------------------------------
    def _tiled_bytes(bq):
        b = (2 * np_ * D * ctx_it            # context block (double-buffered)
             + 2 * D * 2 * hp * ctx_it       # fused weights
             + 2 * np_ * hp * ctx_it         # Q/K scratch (single-buffered)
             + 2 * bq * np_ * out_it         # output block
             + 2 * bq * np_ * 4              # f32 scores / exp temporaries
             + 2 * np_ * 2 * hp * 4)         # f32 projection temporary
        if has_mask:
            b += 2 * bq * np_
        return b

    if block_q is None:
        # int8 mask tiles want >=32 sublanes; keep tiny candidates only maskless.
        cands = (512, 256, 128, 64, 32) if has_mask else (512, 256, 128, 64, 32, 16, 8)
        block_q = np_
        for cand in cands:
            if np_ % cand == 0 and _tiled_bytes(cand) <= _TILED_VMEM_BUDGET:
                block_q = cand
                break
    assert np_ % block_q == 0, f"block_q must divide the (padded) node count {np_}"
    assert block_q == np_ or block_q % 8 == 0, "block_q must be a multiple of 8"

    n_qt = np_ // block_q
    # When a single batch cannot occupy both v7x TensorCores, split the query
    # tiles across a leading parallel axis (projection duplicated per core).
    n_split = 2 if (B == 1 and n_qt >= 2 and n_qt % 2 == 0) else 1
    qpc = n_qt // n_split

    kernel = functools.partial(_gl_tiled_kernel, block_q=block_q, **common)
    in_specs = [
        pl.BlockSpec((1, np_, D), lambda s, b, qi: (b, 0, 0)),   # full context / batch
        pl.BlockSpec((D, 2 * hp), lambda s, b, qi: (0, 0)),      # fused weights
    ]
    args = [context, wqk_t]
    if has_mask:
        if mask_is_2d:
            in_specs.append(
                pl.BlockSpec((block_q, np_), lambda s, b, qi: (s * qpc + qi, 0)))
        else:
            in_specs.append(
                pl.BlockSpec((1, block_q, np_), lambda s, b, qi: (b, s * qpc + qi, 0)))
        args.append(mask)

    out = pl.pallas_call(
        kernel,
        out_shape=jax.ShapeDtypeStruct((B, np_, np_), out_dtype),
        grid_spec=pltpu.PrefetchScalarGridSpec(
            num_scalar_prefetch=0,
            grid=(n_split, B, qpc),
            in_specs=in_specs,
            out_specs=pl.BlockSpec((1, block_q, np_),
                                   lambda s, b, qi: (b, s * qpc + qi, 0)),
            scratch_shapes=[
                pltpu.VMEM((np_, hp), context.dtype),            # Q scratch
                pltpu.VMEM((np_, hp), context.dtype),            # K scratch
            ],
        ),
        compiler_params=pltpu.CompilerParams(
            dimension_semantics=("parallel", "parallel", "arbitrary"),
            vmem_limit_bytes=_VMEM_LIMIT),
        cost_estimate=cost,
    )(*args)
    return out if np_ == N else out[:, :N, :N]


# ----------------------------------------------------------------------------
# Reference + demo
# ----------------------------------------------------------------------------
def _xavier_uniform(key, shape):
    fan_out, fan_in = shape
    bound = math.sqrt(6.0 / (fan_in + fan_out))
    return jax.random.uniform(key, shape, jnp.float32, -bound, bound)


def _reference(context, wq, wk, attn_mask):
    ctx = context.astype(jnp.float32)
    q = ctx @ wq.astype(jnp.float32).T
    k = ctx @ wk.astype(jnp.float32).T
    s = jnp.einsum("bnh,bmh->bnm", q, k) / math.sqrt(wq.shape[0])
    if attn_mask is not None:
        m = attn_mask if attn_mask.ndim == 3 else attn_mask[None]
        s = jnp.where(m != 0, s, -INF)
    return jax.nn.softmax(s, axis=-1)


if __name__ == "__main__":
    # Shapes consistent with the module: context (batch=2, num_nodes=16,
    # input_size=32), hidden_size=32.
    B, N, D, H = 2, 16, 32, 32
    key = jax.random.PRNGKey(0)
    keys = jax.random.split(key, 8)

    context = jax.random.normal(keys[0], (B, N, D), dtype=jnp.float32)
    wq = _xavier_uniform(keys[1], (H, D))       # torch nn.Linear layout (out, in)
    wk = _xavier_uniform(keys[2], (H, D))
    mask3 = (jax.random.uniform(keys[3], (B, N, N)) > 0.2).astype(jnp.float32)

    TOL, TOL_BF16 = 1.5e-2, 6e-2

    def check(out, ref, tol, name):
        assert out.shape == ref.shape, f"{name}: shape {out.shape} vs {ref.shape}"
        assert jnp.allclose(out.astype(jnp.float32), ref, atol=tol, rtol=tol), name

    # 1) per-batch resident path (grid=(B,), parallel), 3-D float mask, bf16 out
    out = jax.block_until_ready(graph_learner_self_attention(context, wq, wk, mask3))
    check(out, _reference(context, wq, wk, mask3), TOL, "tiny/masked")

    # 2) no mask, exact reciprocal, f32 output
    out = jax.block_until_ready(graph_learner_self_attention(
        context, wq, wk, None, out_dtype=jnp.float32, approx_reciprocal=False))
    check(out, _reference(context, wq, wk, None), 1e-2, "tiny/nomask/f32")

    # 3) query-tiled path with 3-D mask (grid=(1, B, 2))
    B2, N2 = 2, 128
    context2 = jax.random.normal(keys[4], (B2, N2, D), dtype=jnp.float32)
    mask3b = (jax.random.uniform(keys[5], (B2, N2, N2)) > 0.2).astype(jnp.float32)
    out = jax.block_until_ready(graph_learner_self_attention(
        context2, wq, wk, mask3b, block_q=64))
    check(out, _reference(context2, wq, wk, mask3b), TOL, "tiled/mask3d")

    # 4) shared 2-D bool mask (kept (N, N), never broadcast to (B, N, N))
    mask2d = jax.random.uniform(keys[6], (N2, N2)) > 0.2
    out = jax.block_until_ready(graph_learner_self_attention(context2, wq, wk, mask2d))
    check(out, _reference(context2, wq, wk, mask2d), TOL, "tiny/mask2d")
    out = jax.block_until_ready(graph_learner_self_attention(
        context2, wq, wk, mask2d, block_q=64))
    check(out, _reference(context2, wq, wk, mask2d), TOL, "tiled/mask2d")

    # 5) non-128-aligned node count (N=144 -> padded to 256), B=1 core split
    B3, N3 = 1, 144
    context3 = jax.random.normal(keys[7], (B3, N3, D), dtype=jnp.float32)
    out = jax.block_until_ready(graph_learner_self_attention(
        context3, wq, wk, None, block_q=128))            # tiled, padded, split=2
    check(out, _reference(context3, wq, wk, None), TOL, "tiled/padded")
    out = jax.block_until_ready(graph_learner_self_attention(context3, wq, wk, None))
    check(out, _reference(context3, wq, wk, None), TOL, "tiny/padded")

    # 6) bf16 inputs + bf16 exponent (EUP win on v6e/v7x)
    ctx_bf = context.astype(jnp.bfloat16)
    wq_bf, wk_bf = wq.astype(jnp.bfloat16), wk.astype(jnp.bfloat16)
    out = jax.block_until_ready(graph_learner_self_attention(
        ctx_bf, wq_bf, wk_bf, mask3, exp_in_bf16=True))
    check(out, _reference(ctx_bf, wq_bf, wk_bf, mask3), TOL_BF16, "tiny/bf16")

    print("KERNEL_OK")
</pallas_src>

<mosaic_0001>
module attributes {stable_mosaic.version = 11 : i64} {
  func.func @_gl_batch_kernel(%arg0: i32, %arg1: memref<1x16x32xf32, #tpu.memory_space<vmem>>, %arg2: memref<32x256xf32, #tpu.memory_space<vmem>>, %arg3: memref<1x16x16xi8, #tpu.memory_space<vmem>>, %arg4: memref<1x16x16xbf16, #tpu.memory_space<vmem>>) attributes {dimension_semantics = [#tpu.dimension_semantics<parallel>], iteration_bounds = array<i64: 2>, scalar_prefetch = 0 : i64, scratch_operands = 0 : i64, tpu.core_type = #tpu.core_type<tc>, window_params = [{transform_indices = @transform_0, window_bounds = array<i64: 1, 16, 32>}, {pipeline_mode = #tpu.pipeline_mode<synchronous>, transform_indices = @transform_1, window_bounds = array<i64: 32, 256>}, {transform_indices = @transform_2, window_bounds = array<i64: 1, 16, 16>}, {transform_indices = @transform_3, window_bounds = array<i64: 1, 16, 16>}]} {
    %c0 = arith.constant 0 : index
    %c0_0 = arith.constant 0 : index
    %c0_1 = arith.constant 0 : index
    %0 = vector.load %arg1[%c0, %c0_0, %c0_1] : memref<1x16x32xf32, #tpu.memory_space<vmem>>, vector<1x16x32xf32>
    %1 = vector.shape_cast %0 : vector<1x16x32xf32> to vector<16x32xf32>
    %c0_2 = arith.constant 0 : index
    %c0_3 = arith.constant 0 : index
    %2 = vector.load %arg2[%c0_2, %c0_3] : memref<32x256xf32, #tpu.memory_space<vmem>>, vector<32x256xf32>
    %cst = arith.constant dense<0.000000e+00> : vector<16x256xf32>
    %3 = tpu.matmul %1, %2, %cst {dimension_numbers = #tpu.dot_dimension_numbers<[1], [0], [0], [1], [0, 0, 1, 1], [], []>} : vector<16x32xf32>, vector<32x256xf32>, vector<16x256xf32> -> vector<16x256xf32>
    %4 = vector.extract_strided_slice %3 {offsets = [0, 0], sizes = [16, 128], strides = [1, 1]} : vector<16x256xf32> to vector<16x128xf32>
    %5 = vector.extract_strided_slice %3 {offsets = [0, 128], sizes = [16, 128], strides = [1, 1]} : vector<16x256xf32> to vector<16x128xf32>
    %cst_4 = arith.constant dense<0.000000e+00> : vector<16x16xf32>
    %6 = tpu.matmul %4, %5, %cst_4 {dimension_numbers = #tpu.dot_dimension_numbers<[1], [1], [0], [0], [0, 0, 1, 0], [], []>} : vector<16x128xf32>, vector<16x128xf32>, vector<16x16xf32> -> vector<16x16xf32>
    %cst_5 = arith.constant 0.176776692 : f32
    %7 = vector.broadcast %cst_5 : f32 to vector<16x16xf32>
    %8 = arith.mulf %6, %7 : vector<16x16xf32>
    %c0_6 = arith.constant 0 : index
    %c0_7 = arith.constant 0 : index
    %c0_8 = arith.constant 0 : index
    %9 = vector.load %arg3[%c0_6, %c0_7, %c0_8] : memref<1x16x16xi8, #tpu.memory_space<vmem>>, vector<1x16x16xi8>
    %10 = vector.shape_cast %9 : vector<1x16x16xi8> to vector<16x16xi8>
    %c0_i8 = arith.constant 0 : i8
    %11 = vector.broadcast %c0_i8 : i8 to vector<16x16xi8>
    %12 = arith.cmpi ne, %10, %11 : vector<16x16xi8>
    %cst_9 = arith.constant -1.000000e+20 : f32
    %13 = vector.broadcast %cst_9 : f32 to vector<16x16xf32>
    %14 = arith.select %12, %8, %13 : vector<16x16xi1>, vector<16x16xf32>
    %cst_10 = arith.constant dense<0xFF800000> : vector<16xf32>
    %15 = vector.multi_reduction <maximumf>, %14, %cst_10 [1] : vector<16x16xf32> to vector<16xf32>
    %16 = vector.shape_cast %15 : vector<16xf32> to vector<16x1xf32>
    %17 = vector.broadcast %16 : vector<16x1xf32> to vector<16x16xf32>
    %18 = arith.subf %14, %17 : vector<16x16xf32>
    %19 = math.exp %18 : vector<16x16xf32>
    %cst_11 = arith.constant dense<0.000000e+00> : vector<16xf32>
    %20 = vector.multi_reduction <add>, %19, %cst_11 [1] : vector<16x16xf32> to vector<16xf32>
    %21 = vector.shape_cast %20 : vector<16xf32> to vector<16x1xf32>
    %22 = tpu.reciprocal %21 {approx = true} : vector<16x1xf32> -> vector<16x1xf32>
    %23 = vector.broadcast %22 : vector<16x1xf32> to vector<16x16xf32>
    %24 = arith.mulf %19, %23 : vector<16x16xf32>
    %25 = arith.truncf %24 : vector<16x16xf32> to vector<16x16xbf16>
    %c0_12 = arith.constant 0 : index
    %c0_13 = arith.constant 0 : index
    %c0_14 = arith.constant 0 : index
    %26 = vector.load %arg4[%c0_12, %c0_13, %c0_14] : memref<1x16x16xbf16, #tpu.memory_space<vmem>>, vector<1x16x16xbf16>
    %27 = vector.shape_cast %26 : vector<1x16x16xbf16> to vector<16x16xbf16>
    %28 = vector.shape_cast %25 : vector<16x16xbf16> to vector<1x16x16xbf16>
    tpu.vector_store %arg4[%c0_12, %c0_13, %c0_14], %28 {strides = array<i32>} : memref<1x16x16xbf16, #tpu.memory_space<vmem>>, vector<1x16x16xbf16>,
    return
  }
  func.func @transform_0(%arg0: i32) -> (i32, i32, i32) {
    %c0_i32 = arith.constant 0 : i32
    %c0_i32_0 = arith.constant 0 : i32
    %c0_i32_1 = arith.constant 0 : i32
    return %arg0, %c0_i32, %c0_i32_0 : i32, i32, i32
  }
  func.func @transform_1(%arg0: i32) -> (i32, i32) {
    %c0_i32 = arith.constant 0 : i32
    %c0_i32_0 = arith.constant 0 : i32
    %c0_i32_1 = arith.constant 0 : i32
    return %c0_i32, %c0_i32_0 : i32, i32
  }
  func.func @transform_2(%arg0: i32) -> (i32, i32, i32) {
    %c0_i32 = arith.constant 0 : i32
    %c0_i32_0 = arith.constant 0 : i32
    %c0_i32_1 = arith.constant 0 : i32
    return %arg0, %c0_i32, %c0_i32_0 : i32, i32, i32
  }
  func.func @transform_3(%arg0: i32) -> (i32, i32, i32) {
    %c0_i32 = arith.constant 0 : i32
    %c0_i32_0 = arith.constant 0 : i32
    %c0_i32_1 = arith.constant 0 : i32
    return %arg0, %c0_i32, %c0_i32_0 : i32, i32, i32
  }
}

</mosaic_0001>

<llo_original>
// kernel: tpu_custom_call.1
$region0: #{tpu_custom_call.1}
  #allocation0 [shape = 'u32[]', space=smem, size = 0x4, offset = 0x4, fixed_abs, tag = 'smem constant byte address 0x4 - core index']
  #allocation1 [shape = 'u32[144,128]{1,0:T(1,128)}', space=vmem, size = 0x12000, scoped, tag = 'internal scratch']
  %s0 = inlined_call_operand.hbm [shape: f32[2,16,32], index: 0, kind: input, shape index: {}]
  %s1 = inlined_call_operand.hbm [shape: f32[32,256], index: 1, kind: input, shape index: {}]
  %s2 = inlined_call_operand.hbm [shape: s8[2,16,16], index: 2, kind: input, shape index: {}]
  %s3 = inlined_call_operand.hbm [shape: bf16[2,16,16], index: 3, kind: output, shape index: {}]
  %s4 = sld [smem:[#allocation0]]
  $region57: #{tpu_custom_call.1} parent=0
    _
  %s6 = ssub.s32 1, %s4
  %s7 = scalar_select 0, %s6, %s4
  $region1: #{tpu_custom_call.1} parent=0
    #allocation2 [shape = 'u8[16384]{0}', space=vmem, size = 0x4000, scoped, tag = 'input window, operand 0']
    #allocation3 [shape = 's32[2]{0}', space=sflag, size = 0x8, scoped, tag = 'scoped memory for tpu_custom_call.1']
    #allocation4 [shape = 's32[2]{0}', space=sflag, size = 0x8, scoped, tag = 'scoped memory for tpu_custom_call.1']
    #allocation5 [shape = 'u8[32768]{0}', space=vmem, size = 0x8000, scoped, tag = 'input window, operand 1, single buffered']
    #allocation6 [shape = 's32[1]{0}', space=sflag, size = 0x4, scoped, tag = 'scoped memory for tpu_custom_call.1']
    #allocation7 [shape = 'u8[4096]{0}', space=vmem, size = 0x1000, scoped, tag = 'input window, operand 2']
    #allocation8 [shape = 'u8[8192]{0}', space=vmem, size = 0x2000, scoped, tag = 'output window, operand 0']
    %8 = vsyncpa [#allocation3], 0
    %s9 = scalar_lea.sflag [#allocation3], 1
    %10 = vsyncpa %s9, 0
    %11 = vsyncpa [#allocation6], 0
    %12 = vsyncpa [#allocation4], 0
    %s13 = scalar_lea.sflag [#allocation4], 1
    %14 = vsyncpa %s13, 0
    loop: start=0, step=1, limit=4
    $region2: #{tpu_custom_call.1} parent=1 // loop_pre_header
      _
    $region3: #{tpu_custom_call.1} parent=1 // loop_header
      %s16 = sphi 0, %s20
      %p17 = scmp.ge.s32.totalorder %s16, 4
      %s26 = sphi 0, %s28
      %s29 = sphi 0, %s26
      %s30 = sphi 0, %s29
      %s46 = sphi 0, %s30
      %s50 = sphi 0, %s50
      %s52 = sphi 0, %s50
      %s53 = sphi 0, %s52
      %s67 = sphi 0, %s53
      %s73 = sphi 0, %s75
      %s76 = sphi 0, %s73
      %s77 = sphi 0, %s76
      %s93 = sphi 0, %s77
      %s99 = sphi 0, %s101
      %s102 = sphi 0, %s99
      %s103 = sphi 0, %s102
      %s119 = sphi 0, %s103
    $region4: #{tpu_custom_call.1} parent=1 // loop_header_branch
      %19 = sbr.rel (%p17) target = $region8
    $region5: #{tpu_custom_call.1} parent=1 // loop_body
      %s21 = ssub.s32 %s16, 1
      %s22 = ssub.s32 %s16, 2
      %s23 = sadd.s32 %s16, 1
      %s24 = ssub.s32 %s16, %s23
      %p25 = scmp.eq.s32.totalorder %s24, 0
      %s27 = sadd.s32 %s26, 1
      %s28 = scalar_select %p25, %s26, %s27
      %p31 = pneg %p25
      %p32 = scmp.eq.s32.totalorder %s16, 1
      %p33 = por %p31, %p32
      %p34 = scmp.ne.s32.totalorder %s26, %s29
      %p35 = scmp.eq.s32.totalorder %s16, 0
      %p36 = por %p34, %p35
      %p37 = scmp.ne.s32.totalorder %s26, %s29
      %p38 = scmp.eq.s32.totalorder %s21, 1
      %p39 = por %p37, %p38
      %p40 = scmp.ne.s32.totalorder %s29, %s30
      %p41 = scmp.eq.s32.totalorder %s21, 0
      %p42 = por %p40, %p41
      %p43 = scmp.ne.s32.totalorder %s29, %s30
      %p44 = scmp.eq.s32.totalorder %s22, 1
      %p45 = por %p43, %p44
      %p47 = scmp.ne.s32.totalorder %s30, %s46
      %p48 = scmp.eq.s32.totalorder %s22, 0
      %p49 = por %p47, %p48
      %s51 = sadd.s32 %s50, 1
      %p54 = scmp.eq.s32.totalorder %s16, 1
      %p55 = scmp.ne.s32.totalorder %s50, %s52
      %p56 = scmp.eq.s32.totalorder %s16, 0
      %p57 = por %p55, %p56
      %p58 = scmp.ne.s32.totalorder %s50, %s52
      %p59 = scmp.eq.s32.totalorder %s21, 1
      %p60 = por %p58, %p59
      %p61 = scmp.ne.s32.totalorder %s52, %s53
      %p62 = scmp.eq.s32.totalorder %s21, 0
      %p63 = por %p61, %p62
      %p64 = scmp.ne.s32.totalorder %s52, %s53
      %p65 = scmp.eq.s32.totalorder %s22, 1
      %p66 = por %p64, %p65
      %p68 = scmp.ne.s32.totalorder %s53, %s67
      %p69 = scmp.eq.s32.totalorder %s22, 0
      %p70 = por %p68, %p69
      %s71 = ssub.s32 %s16, %s23
      %p72 = scmp.eq.s32.totalorder %s71, 0
      %s74 = sadd.s32 %s73, 1
      %s75 = scalar_select %p72, %s73, %s74
      %p78 = pneg %p72
      %p79 = scmp.eq.s32.totalorder %s16, 1
      %p80 = por %p78, %p79
      %p81 = scmp.ne.s32.totalorder %s73, %s76
      %p82 = scmp.eq.s32.totalorder %s16, 0
      %p83 = por %p81, %p82
      %p84 = scmp.ne.s32.totalorder %s73, %s76
      %p85 = scmp.eq.s32.totalorder %s21, 1
      %p86 = por %p84, %p85
      %p87 = scmp.ne.s32.totalorder %s76, %s77
      %p88 = scmp.eq.s32.totalorder %s21, 0
      %p89 = por %p87, %p88
      %p90 = scmp.ne.s32.totalorder %s76, %s77
      %p91 = scmp.eq.s32.totalorder %s22, 1
      %p92 = por %p90, %p91
      %p94 = scmp.ne.s32.totalorder %s77, %s93
      %p95 = scmp.eq.s32.totalorder %s22, 0
      %p96 = por %p94, %p95
      %s97 = ssub.s32 %s16, %s23
      %p98 = scmp.eq.s32.totalorder %s97, 0
      %s100 = sadd.s32 %s99, 1
      %s101 = scalar_select %p98, %s99, %s100
      %p104 = pneg %p98
      %p105 = scmp.eq.s32.totalorder %s16, 1
      %p106 = por %p104, %p105
      %p107 = scmp.ne.s32.totalorder %s99, %s102
      %p108 = scmp.eq.s32.totalorder %s16, 0
      %p109 = por %p107, %p108
      %p110 = scmp.ne.s32.totalorder %s99, %s102
      %p111 = scmp.eq.s32.totalorder %s21, 1
      %p112 = por %p110, %p111
      %p113 = scmp.ne.s32.totalorder %s102, %s103
      %p114 = scmp.eq.s32.totalorder %s21, 0
      %p115 = por %p113, %p114
      %p116 = scmp.ne.s32.totalorder %s102, %s103
      %p117 = scmp.eq.s32.totalorder %s22, 1
      %p118 = por %p116, %p117
      %p120 = scmp.ne.s32.totalorder %s103, %s119
      %p121 = scmp.eq.s32.totalorder %s22, 0
      %p122 = por %p120, %p121
      %p123 = scmp.le.s32.totalorder 1, %s16
      %p124 = scmp.lt.s32.totalorder %s16, 3
      %p125 = pnand %p123, %p124
      %p126 = pneg %p125
      // Predicated region
      $region9: #{tpu_custom_call.1} parent=5 // pred_check
        _
      $region10: #{tpu_custom_call.1} parent=5 // pred_check_branch
        %128 = sbr.rel (%p125) target = $region12
      $region11: #{tpu_custom_call.1} parent=5 // pred_region
        %s129 = ssub.s32 %s16, 1
        // Predicated region
        $region13: #{tpu_custom_call.1} parent=11 // pred_check
          %p130 = pneg %p63
        $region14: #{tpu_custom_call.1} parent=11 // pred_check_branch
          %132 = sbr.rel (%p130) target = $region16
        $region15: #{tpu_custom_call.1} parent=11 // pred_region
          %s134 = ssub.s32 1024, 1024
          %135 = vsyncadd [#allocation6], %s134
          %s136 = sshll.u32 [#allocation5], 4
          %s137 = int_to_ptr.vmem [resolvable:$true] %s136
          %142 = dma.hbm_to_vmem [thread:$0]  %s1, 1024, %s137, [#allocation6], 256, 256, 16
        $region16: #{tpu_custom_call.1} parent=11 // pred_fallthru
          _
      $region12: #{tpu_custom_call.1} parent=5 // pred_fallthru
        _
      %p143 = scmp.lt.s32.totalorder %s16, 2
      // Predicated region
      $region17: #{tpu_custom_call.1} parent=5 // pred_check
        %p144 = pneg %p143
      $region18: #{tpu_custom_call.1} parent=5 // pred_check_branch
        %146 = sbr.rel (%p144) target = $region20
      $region19: #{tpu_custom_call.1} parent=5 // pred_region
        // Predicated region
        $region21: #{tpu_custom_call.1} parent=19 // pred_check
          %p147 = pneg %p36
        $region22: #{tpu_custom_call.1} parent=19 // pred_check_branch
          %149 = sbr.rel (%p147) target = $region24
        $region23: #{tpu_custom_call.1} parent=19 // pred_region
          %s150 = sand.u32 %s16, 1
          %s151 = scalar_lea.sflag [#allocation3], %s150
          %s152 = sand.u32 %s26, 1
          %s153 = smul.addr %s152, 16
          %s154 = scalar_lea.vmem [#allocation2], %s153
          %s156 = ssub.s32 256, 256
          %157 = vsyncadd %s151, %s156
          %s158 = smul.addr %s16, 2
          %s159 = smul.addr %s158, 128
          %s160 = scalar_lea.hbm %s0, %s159
          %s161 = sshll.u32 %s154, 4
          %s162 = int_to_ptr.vmem [resolvable:$true] %s161
          %167 = dma.hbm_to_vmem [thread:$0]  %s160, 256, %s162, %s151, 128, 128, 8
        $region24: #{tpu_custom_call.1} parent=19 // pred_fallthru
          _
        // Predicated region
        $region25: #{tpu_custom_call.1} parent=19 // pred_check
          %p168 = pneg %p83
        $region26: #{tpu_custom_call.1} parent=19 // pred_check_branch
          %170 = sbr.rel (%p168) target = $region28
        $region27: #{tpu_custom_call.1} parent=19 // pred_region
          %s171 = sand.u32 %s16, 1
          %s172 = scalar_lea.sflag [#allocation3], %s171
          %s173 = sand.u32 %s73, 1
          %s174 = smul.addr %s173, 4
          %s175 = scalar_lea.vmem [#allocation7], %s174
          %s177 = ssub.s32 64, 64
          %178 = vsyncadd %s172, %s177
          %s179 = smul.addr %s16, 2
          %s180 = smul.addr %s179, 32
          %s181 = scalar_lea.hbm %s2, %s180
          %s182 = sshll.u32 %s175, 4
          %s183 = int_to_ptr.vmem [resolvable:$true] %s182
          %188 = dma.hbm_to_vmem [thread:$0]  %s181, 64, %s183, %s172, 32, 32, 2
        $region28: #{tpu_custom_call.1} parent=19 // pred_fallthru
          _
      $region20: #{tpu_custom_call.1} parent=5 // pred_fallthru
        _
      %p189 = scmp.le.s32.totalorder 1, %s16
      %p190 = scmp.lt.s32.totalorder %s16, 3
      %p191 = pnand %p189, %p190
      %p192 = pneg %p191
      // Predicated region
      $region29: #{tpu_custom_call.1} parent=5 // pred_check
        _
      $region30: #{tpu_custom_call.1} parent=5 // pred_check_branch
        %194 = sbr.rel (%p191) target = $region32
      $region31: #{tpu_custom_call.1} parent=5 // pred_region
        %s195 = ssub.s32 %s16, 1
        %s196 = sand.u32 %s21, 1
        %s197 = scalar_lea.sflag [#allocation3], %s196
        %s198 = sand.u32 %s29, 1
        %s199 = smul.addr %s198, 16
        %s200 = scalar_lea.vmem [#allocation2], %s199
        // Predicated region
        $region33: #{tpu_custom_call.1} parent=31 // pred_check
          %p201 = pneg %p42
        $region34: #{tpu_custom_call.1} parent=31 // pred_check_branch
          %203 = sbr.rel (%p201) target = $region36
        $region35: #{tpu_custom_call.1} parent=31 // pred_region
          %204 = dma.done %s197, 256
        $region36: #{tpu_custom_call.1} parent=31 // pred_fallthru
          _
        // Predicated region
        $region37: #{tpu_custom_call.1} parent=31 // pred_check
          %p205 = pneg %p63
        $region38: #{tpu_custom_call.1} parent=31 // pred_check_branch
          %207 = sbr.rel (%p205) target = $region40
        $region39: #{tpu_custom_call.1} parent=31 // pred_region
          %208 = dma.done [#allocation6], 1024
        $region40: #{tpu_custom_call.1} parent=31 // pred_fallthru
          _
        %s209 = sand.u32 %s21, 1
        %s210 = scalar_lea.sflag [#allocation3], %s209
        %s211 = sand.u32 %s76, 1
        %s212 = smul.addr %s211, 4
        %s213 = scalar_lea.vmem [#allocation7], %s212
        // Predicated region
        $region41: #{tpu_custom_call.1} parent=31 // pred_check
          %p214 = pneg %p89
        $region42: #{tpu_custom_call.1} parent=31 // pred_check_branch
          %216 = sbr.rel (%p214) target = $region44
        $region43: #{tpu_custom_call.1} parent=31 // pred_region
          %217 = dma.done %s210, 64
        $region44: #{tpu_custom_call.1} parent=31 // pred_fallthru
          _
        %s218 = sand.u32 %s21, 1
        %s219 = scalar_lea.sflag [#allocation3], %s218
        %s220 = sand.u32 %s29, 1
        %s221 = smul.addr %s220, 16
        %s222 = scalar_lea.vmem [#allocation2], %s221
        %p223 = pneg %p42
        %p224 = pneg %p39
        %p225 = pneg %p63
        %p226 = pneg %p60
        %s227 = sand.u32 %s21, 1
        %s228 = scalar_lea.sflag [#allocation3], %s227
        %s229 = sand.u32 %s76, 1
        %s230 = smul.addr %s229, 4
        %s231 = scalar_lea.vmem [#allocation7], %s230
        %p232 = pneg %p89
        %p233 = pneg %p86
        %p234 = pneg %p115
        %p235 = pneg %p112
        %s236 = sand.u32 %s102, 1
        %s237 = scalar_lea.sflag [#allocation4], %s236
        %s238 = sand.u32 %s102, 1
        %s239 = smul.addr %s238, 8
        %s240 = scalar_lea.vmem [#allocation8], %s239
        %v243 = vld [vmem:[%s200] sm:$0xff]
        %v244 = vld [vmem:[%s200 + $0x8] sm:$0xff]
        %v245 = vld [vmem:[#allocation5] sm:$0xff]
        %v246 = vld [vmem:[#allocation5 + $0x8] sm:$0xff]
        %v247 = vld [vmem:[#allocation5 + $0x10] sm:$0xff]
        %v248 = vld [vmem:[#allocation5 + $0x18] sm:$0xff]
        %v249 = vld [vmem:[#allocation5 + $0x20] sm:$0xff]
        %v250 = vld [vmem:[#allocation5 + $0x28] sm:$0xff]
        %v251 = vld [vmem:[#allocation5 + $0x30] sm:$0xff]
        %v252 = vld [vmem:[#allocation5 + $0x38] sm:$0xff]
        %vm253 = vcmask 261120
        %v255 = vsel %vm253, %v243, 0
        %v258 = vsel %vm253, %v244, 0
        %260 = vmatprep.subr.mxu0 %v246
        %261 = vmatpush1.msra.mxu0 %v245
        %262 = vmatprep.subr.mxu0 %v248
        %263 = vmatpush1.msra.mxu0 %v247
        %264 = vmatprep.subr.mxu0 %v250
        %265 = vmatpush1.msra.mxu0 %v249
        %266 = vmatprep.subr.mxu0 %v252
        %267 = vmatpush1.msra.mxu0 %v251
        %268 = vmatprep.subr.mxu0 0.0
        %269 = vmatpush1.msra.mxu0 0.0
        %270 = vmatprep.subr.mxu0 0.0
        %271 = vmatpush1.msra.mxu0 0.0
        %272 = vmatprep.subr.mxu0 0.0
        %273 = vmatpush1.msra.mxu0 0.0
        %274 = vmatprep.subr.mxu0 0.0
        %275 = vmatpush1.msra.mxu0 0.0
        %276 = vmatprep.subr.mxu0 0.0
        %277 = vmatpush1.msra.mxu0 0.0
        %278 = vmatprep.subr.mxu0 0.0
        %279 = vmatpush1.msra.mxu0 0.0
        %280 = vmatprep.subr.mxu0 0.0
        %281 = vmatpush1.msra.mxu0 0.0
        %282 = vmatprep.subr.mxu0 0.0
        %283 = vmatpush1.msra.mxu0 0.0
        %284 = vmatprep.subr.mxu0 0.0
        %285 = vmatpush1.msra.mxu0 0.0
        %286 = vmatprep.subr.mxu0 0.0
        %287 = vmatpush1.msra.mxu0 0.0
        %288 = vmatprep.subr.mxu0 0.0
        %289 = vmatpush1.msra.mxu0 0.0
        %290 = vmatprep.subr.mxu0 0.0
        %291 = vmatpush1.msra.mxu0 0.0
        %292 = vmatprep.subr.mxu0 0.0
        %293 = vmatpush1.msra.mxu0 0.0
        %294 = vmatprep.subr.mxu0 0.0
        %295 = vmatpush1.msra.mxu0 0.0
        %296 = vmatprep.subr.mxu0 0.0
        %297 = vmatpush1.msra.mxu0 0.0
        %298 = vmatprep.subr.mxu0 0.0
        %299 = vmatpush1.msra.mxu0 0.0
        %300 = vmatprep.subr.mxu0 0.0
        %301 = vmatpush1.msra.mxu0 0.0
        %302 = vmatprep.subr.mxu0 0.0
        %303 = vmatpush1.msra.mxu0 0.0
        %304 = vmatprep.subr.mxu0 0.0
        %305 = vmatpush1.msra.mxu0 0.0
        %306 = vmatprep.subr.mxu0 0.0
        %307 = vmatpush1.msra.mxu0 0.0
        %308 = vmatprep.subr.mxu0 0.0
        %309 = vmatpush1.msra.mxu0 0.0
        %310 = vmatprep.subr.mxu0 0.0
        %311 = vmatpush1.msra.mxu0 0.0
        %312 = vmatprep.subr.mxu0 0.0
        %313 = vmatpush1.msra.mxu0 0.0
        %314 = vmatprep.subr.mxu0 0.0
        %315 = vmatpush1.msra.mxu0 0.0
        %316 = vmatprep.subr.mxu0 0.0
        %317 = vmatpush1.msra.mxu0 0.0
        %318 = vmatprep.subr.mxu0 0.0
        %319 = vmatpush1.msra.mxu0 0.0
        %320 = vmatprep.subr.mxu0 0.0
        %321 = vmatpush1.msra.mxu0 0.0
        %322 = vmatprep.subr.mxu0 0.0
        %323 = vmatpush1.msra.mxu0 0.0
        %324 = vmatprep.mubr.f32.mxu0 0.0
        %325 = vmatmul.mubr.f32.gmra.mrb[0].mxu0 %v255
        %v326 = vpop.f32.mrb[0].mxu0
        %v327 = vadd.f32 0.0, %v326
        %v328 = vpop.f32.mrb[0].mxu0
        %v329 = vadd.f32 0.0, %v328
        %330 = vmatprep.mubr.f32.mxu0 0.0
        %331 = vmatmul.mubr.f32.gmra.mrb[0].mxu0 %v258
        %v332 = vpop.f32.mrb[0].mxu0
        %v333 = vadd.f32 0.0, %v332
        %v334 = vpop.f32.mrb[0].mxu0
        %v335 = vadd.f32 0.0, %v334
        %336 = vdwg.mxu0
        %337 = vmatprep.subr.mxu0 0.0
        %338 = vmatpush1.xpose.msra.mxu0 %v329
        %339 = vmatprep.subr.mxu0 0.0
        %340 = vmatpush1.xpose.msra.mxu0 %v335
        %341 = vmatprep.subr.mxu0 0.0
        %342 = vmatpush1.xpose.msra.mxu0 0.0
        %343 = vmatprep.subr.mxu0 0.0
        %344 = vmatpush1.xpose.msra.mxu0 0.0
        %345 = vmatprep.subr.mxu0 0.0
        %346 = vmatpush1.xpose.msra.mxu0 0.0
        %347 = vmatprep.subr.mxu0 0.0
        %348 = vmatpush1.xpose.msra.mxu0 0.0
        %349 = vmatprep.subr.mxu0 0.0
        %350 = vmatpush1.xpose.msra.mxu0 0.0
        %351 = vmatprep.subr.mxu0 0.0
        %352 = vmatpush1.xpose.msra.mxu0 0.0
        %353 = vmatprep.subr.mxu0 0.0
        %354 = vmatpush1.xpose.msra.mxu0 0.0
        %355 = vmatprep.subr.mxu0 0.0
        %356 = vmatpush1.xpose.msra.mxu0 0.0
        %357 = vmatprep.subr.mxu0 0.0
        %358 = vmatpush1.xpose.msra.mxu0 0.0
        %359 = vmatprep.subr.mxu0 0.0
        %360 = vmatpush1.xpose.msra.mxu0 0.0
        %361 = vmatprep.subr.mxu0 0.0
        %362 = vmatpush1.xpose.msra.mxu0 0.0
        %363 = vmatprep.subr.mxu0 0.0
        %364 = vmatpush1.xpose.msra.mxu0 0.0
        %365 = vmatprep.subr.mxu0 0.0
        %366 = vmatpush1.xpose.msra.mxu0 0.0
        %367 = vmatprep.subr.mxu0 0.0
        %368 = vmatpush1.xpose.msra.mxu0 0.0
        %369 = vmatprep.subr.mxu0 0.0
        %370 = vmatpush1.xpose.msra.mxu0 0.0
        %371 = vmatprep.subr.mxu0 0.0
        %372 = vmatpush1.xpose.msra.mxu0 0.0
        %373 = vmatprep.subr.mxu0 0.0
        %374 = vmatpush1.xpose.msra.mxu0 0.0
        %375 = vmatprep.subr.mxu0 0.0
        %376 = vmatpush1.xpose.msra.mxu0 0.0
        %377 = vmatprep.subr.mxu0 0.0
        %378 = vmatpush1.xpose.msra.mxu0 0.0
        %379 = vmatprep.subr.mxu0 0.0
        %380 = vmatpush1.xpose.msra.mxu0 0.0
        %381 = vmatprep.subr.mxu0 0.0
        %382 = vmatpush1.xpose.msra.mxu0 0.0
        %383 = vmatprep.subr.mxu0 0.0
        %384 = vmatpush1.xpose.msra.mxu0 0.0
        %385 = vmatprep.subr.mxu0 0.0
        %386 = vmatpush1.xpose.msra.mxu0 0.0
        %387 = vmatprep.subr.mxu0 0.0
        %388 = vmatpush1.xpose.msra.mxu0 0.0
        %389 = vmatprep.subr.mxu0 0.0
        %390 = vmatpush1.xpose.msra.mxu0 0.0
        %391 = vmatprep.subr.mxu0 0.0
        %392 = vmatpush1.xpose.msra.mxu0 0.0
        %393 = vmatprep.subr.mxu0 0.0
        %394 = vmatpush1.xpose.msra.mxu0 0.0
        %395 = vmatprep.subr.mxu0 0.0
        %396 = vmatpush1.xpose.msra.mxu0 0.0
        %397 = vmatprep.subr.mxu0 0.0
        %398 = vmatpush1.xpose.msra.mxu0 0.0
        %399 = vmatprep.subr.mxu0 0.0
        %400 = vmatpush1.xpose.msra.mxu0 0.0
        %401 = vmatprep.mubr.f32.mxu0 0.0
        %402 = vmatmul.mubr.f32.gmra.mrb[0].mxu0 %v327
        %v403 = vpop.f32.mrb[0].mxu0
        %v404 = vadd.f32 0.0, %v403
        %v405 = vpop.f32.mrb[0].mxu0
        %406 = vmatprep.mubr.f32.mxu0 0.0
        %407 = vmatmul.mubr.f32.gmra.mrb[0].mxu0 %v333
        %v408 = vpop.f32.mrb[0].mxu0
        %v409 = vadd.f32 0.0, %v408
        %v410 = vpop.f32.mrb[0].mxu0
        %411 = vdwg.mxu0
        %v412 = vmul.f32 %v404, 0.17677669
        %v413 = vmul.f32 %v409, 0.17677669
        %v414 = vld [vmem:[%s213] sm:$0x3]
        %v415 = vld [vmem:[%s213 + $0x2] sm:$0x3]
        %vm416 = vnez %v414
        %vm417 = vnez %v415
        %v418 = vsel %vm416, 16843009, 0
        %v419 = vsel %vm417, 16843009, 0
        %v420 = vunpack.c.0.s8 %v418
        %v421 = vunpack.c.0.s8 %v419
        %vm422 = vcmp.ne.s32.totalorder %v420, 0
        %vm423 = vcmp.ne.s32.totalorder %v421, 0
        %v424 = vsel %vm422, %v412, -1e+20
        %v425 = vsel %vm423, %v413, -1e+20
        %vm426 = vcmask 130048
        %v427 = vsel %vm426, %v424, -inf
        %428 = vmax.xlane.f32.xlu0 %v427
        %v429 = vpop.xlane.xlu0 %428
        %v430 = vsel %vm426, %v425, -inf
        %431 = vmax.xlane.f32.xlu0 %v430
        %v432 = vpop.xlane.xlu0 %431
        %v433 = vsub.f32 %v424, %v429
        %v434 = vsub.f32 %v425, %v432
        %v435 = vmul.f32 %v433, 1.442695
        %v436 = vpow.pop %v435
        %v437 = vmul.f32 %v434, 1.442695
        %v438 = vpow.pop %v437
        %v439 = vsel %vm426, %v436, 0.0
        %440 = vadd.xlane.f32.xlu0 %v439
        %v441 = vpop.xlane.xlu0 %440
        %v442 = vsel %vm426, %v438, 0.0
        %443 = vadd.xlane.f32.xlu0 %v442
        %v444 = vpop.xlane.xlu0 %443
        %v445 = vrcp.pop %v441
        %v446 = vrcp.pop %v444
        %v447 = vmul.f32 %v436, %v445
        %v448 = vmul.f32 %v438, %v446
        %v449 = vpack.c.bf16 %v448, %v447
        %v451 = vunpack.c.l.b16 %v449
        %v452 = vunpack.c.h.b16 %v449
        %v453 = vpack.c.b16 %v451, %v451
        %v454 = vpack.c.b16 %v452, %v452
        %vm457 = vcmask 125952
        %458 = vst.msk [vmem:[%s240] sm:$0xf] %vm457, %v453
        %459 = vst.msk [vmem:[%s240 + $0x4] sm:$0xf] %vm457, %v454
        %s460 = sand.u32 %s102, 1
        %s461 = scalar_lea.sflag [#allocation4], %s460
        %s462 = sand.u32 %s102, 1
        %s463 = smul.addr %s462, 8
        %s464 = scalar_lea.vmem [#allocation8], %s463
        // Predicated region
        $region45: #{tpu_custom_call.1} parent=31 // pred_check
          %p465 = pneg %p112
        $region46: #{tpu_custom_call.1} parent=31 // pred_check_branch
          %467 = sbr.rel (%p465) target = $region48
        $region47: #{tpu_custom_call.1} parent=31 // pred_region
          %s469 = ssub.s32 128, 128
          %470 = vsyncadd %s461, %s469
          %s471 = smul.addr %s21, 2
          %s472 = smul.addr %s471, 64
          %s473 = scalar_lea.hbm %s3, %s472
          %s474 = sshll.u32 %s464, 4
          %s475 = int_to_ptr.vmem [resolvable:$true] %s474
          %480 = dma.vmem_to_hbm [thread:$0]  %s475, 128, %s473, %s461, 64, 64, 4
        $region48: #{tpu_custom_call.1} parent=31 // pred_fallthru
          _
      $region32: #{tpu_custom_call.1} parent=5 // pred_fallthru
        _
      %p481 = scmp.le.s32.totalorder 2, %s16
      // Predicated region
      $region49: #{tpu_custom_call.1} parent=5 // pred_check
        %p482 = pneg %p481
      $region50: #{tpu_custom_call.1} parent=5 // pred_check_branch
        %484 = sbr.rel (%p482) target = $region52
      $region51: #{tpu_custom_call.1} parent=5 // pred_region
        %s485 = ssub.s32 %s16, 2
        // Predicated region
        $region53: #{tpu_custom_call.1} parent=51 // pred_check
          %p486 = pneg %p118
        $region54: #{tpu_custom_call.1} parent=51 // pred_check_branch
          %488 = sbr.rel (%p486) target = $region56
        $region55: #{tpu_custom_call.1} parent=51 // pred_region
          %s489 = sand.u32 %s103, 1
          %s490 = scalar_lea.sflag [#allocation4], %s489
          %s491 = sand.u32 %s103, 1
          %s492 = smul.addr %s491, 8
          %s493 = scalar_lea.vmem [#allocation8], %s492
          %494 = dma.done %s490, 128
        $region56: #{tpu_custom_call.1} parent=51 // pred_fallthru
          _
      $region52: #{tpu_custom_call.1} parent=5 // pred_fallthru
        _
    $region6: #{tpu_custom_call.1} parent=1 // loop_footer
      %s20 = sadd.s32 1, %s16
    $region7: #{tpu_custom_call.1} parent=1 // loop_footer_branch
      %15 = sbr.rel target = $region3
    $region8: #{tpu_custom_call.1} parent=1 // loop_exit
      _
    %495 = vsyncpa [#allocation3], 1
    %s496 = scalar_lea.sflag [#allocation3], 1
    %497 = vsyncpa %s496, 1
    %498 = vsyncpa [#allocation6], 1
    %499 = vsyncpa [#allocation4], 1
    %s500 = scalar_lea.sflag [#allocation4], 1
    %501 = vsyncpa %s500, 1

</llo_original>
